<compile_context>
chip_gen: v7x
topology: tpu7x:2x2x1
jax: 0.10.0
libtpu: 0.0.40
codegen_flags: <defaults>
</compile_context>

<pallas_src>
import jax
import jax.numpy as jnp
from jax.experimental import pallas as pl
from jax.experimental.pallas import tpu as pltpu


def _round_up(x, m):
    return (x + m - 1) // m * m


def make_squash_gaussian_head(feature_dim, output_dim, max_action=1.0,
                              first_act=True, compute_dtype=jnp.float32,
                              tile_b=512):
    """Returns forward(feature (B,F), w (F,2A), b (1,2A) or (2A,), eps (B,A)) -> (B,A)."""
    A = output_dim

    def kernel(x_ref, wm_ref, ws_ref, bm_ref, bs_ref, eps_ref, o_ref):
        x = x_ref[...]
        if not first_act:
            x = jnp.maximum(x, 0.0)  # nn.ReLU() when first_act=False
        # Two lane-aligned dots (no mid-vreg logits split); f32 MXU accumulate.
        mean = jnp.dot(x, wm_ref[...],
                       preferred_element_type=jnp.float32) + bm_ref[...]
        log_std = jnp.dot(x, ws_ref[...],
                          preferred_element_type=jnp.float32) + bs_ref[...]
        # Normal(mean, std).sample() value path == mean + exp(log_std) * eps.
        action = mean + jnp.exp(log_std) * eps_ref[...]
        o_ref[...] = (jnp.tanh(action) * max_action).astype(o_ref.dtype)

    def forward(feature, w, b, eps):
        B, F = feature.shape
        assert F == feature_dim
        assert w.shape == (feature_dim, 2 * A)
        b2 = jnp.reshape(b, (1, 2 * A)).astype(jnp.float32)

        # ---- wrapper-side layout plumbing (no extra compute) --------------
        A_pad = _round_up(A, 128)                 # lane-dense output/eps
        TB = min(tile_b, _round_up(B, 8))         # batch tile (multiple of 8)
        B_pad = _round_up(B, TB)

        w_mean = jnp.pad(w[:, :A], ((0, 0), (0, A_pad - A))).astype(compute_dtype)
        w_lstd = jnp.pad(w[:, A:], ((0, 0), (0, A_pad - A))).astype(compute_dtype)
        b_mean = jnp.pad(b2[:, :A], ((0, 0), (0, A_pad - A)))
        b_lstd = jnp.pad(b2[:, A:], ((0, 0), (0, A_pad - A)))
        x_p = jnp.pad(feature, ((0, B_pad - B), (0, 0))).astype(compute_dtype)
        eps_p = jnp.pad(eps.astype(jnp.float32),
                        ((0, B_pad - B), (0, A_pad - A)))

        grid = (B_pad // TB,)
        out = pl.pallas_call(
            kernel,
            out_shape=jax.ShapeDtypeStruct((B_pad, A_pad), jnp.float32),
            grid=grid,
            in_specs=[
                pl.BlockSpec((TB, feature_dim), lambda i: (i, 0)),
                # weights/bias stay resident in VMEM across all batch tiles:
                pl.BlockSpec((feature_dim, A_pad), lambda i: (0, 0)),
                pl.BlockSpec((feature_dim, A_pad), lambda i: (0, 0)),
                pl.BlockSpec((1, A_pad), lambda i: (0, 0)),
                pl.BlockSpec((1, A_pad), lambda i: (0, 0)),
                pl.BlockSpec((TB, A_pad), lambda i: (i, 0)),
            ],
            out_specs=pl.BlockSpec((TB, A_pad), lambda i: (i, 0)),
            compiler_params=pltpu.CompilerParams(
                dimension_semantics=("parallel",)),
        )(x_p, w_mean, w_lstd, b_mean, b_lstd, eps_p)
        return out[:B, :A]

    return jax.jit(forward)


if __name__ == "__main__":
    # Small shapes consistent with the module.
    batch = 2
    feature_dim = 32
    output_dim = 8          # head produces 2*output_dim logits internally
    max_action = 1.0

    key = jax.random.PRNGKey(0)
    k_x, k_w, k_b, k_eps = jax.random.split(key, 4)

    # Deterministic parameter init (PyTorch Linear-style uniform bound).
    bound = 1.0 / (feature_dim ** 0.5)
    w = jax.random.uniform(k_w, (feature_dim, 2 * output_dim), jnp.float32,
                           -bound, bound)
    b = jax.random.uniform(k_b, (1, 2 * output_dim), jnp.float32,
                           -bound, bound)
    feature = jax.random.normal(k_x, (batch, feature_dim), jnp.float32)
    eps = jax.random.normal(k_eps, (batch, output_dim), jnp.float32)

    # ---- f32 path: exact semantics check vs plain-JAX reference -----------
    head_f32 = make_squash_gaussian_head(feature_dim, output_dim,
                                         max_action=max_action, first_act=True,
                                         compute_dtype=jnp.float32)
    out = jax.block_until_ready(head_f32(feature, w, b, eps))

    logits_ref = feature @ w + b
    mean_ref, log_std_ref = logits_ref[:, :output_dim], logits_ref[:, output_dim:]
    ref = jnp.tanh(mean_ref + jnp.exp(log_std_ref) * eps) * max_action
    assert out.shape == (batch, output_dim)
    assert jnp.allclose(out, ref, atol=1e-5, rtol=1e-5)

    # ---- bf16-input path (v6e/v7x bandwidth optimization) ------------------
    head_bf16 = make_squash_gaussian_head(feature_dim, output_dim,
                                          max_action=max_action, first_act=True,
                                          compute_dtype=jnp.bfloat16)
    out_bf = jax.block_until_ready(head_bf16(feature, w, b, eps))

    logits_bf = jnp.dot(feature.astype(jnp.bfloat16), w.astype(jnp.bfloat16),
                        preferred_element_type=jnp.float32) + b
    mean_bf, log_std_bf = logits_bf[:, :output_dim], logits_bf[:, output_dim:]
    ref_bf = jnp.tanh(mean_bf + jnp.exp(log_std_bf) * eps) * max_action
    assert out_bf.shape == (batch, output_dim)
    assert jnp.allclose(out_bf, ref_bf, atol=5e-3, rtol=5e-3)

    print("KERNEL_OK")
</pallas_src>

<mosaic_0001>
module attributes {stable_mosaic.version = 11 : i64} {
  func.func @kernel(%arg0: i32, %arg1: memref<8x32xf32, #tpu.memory_space<vmem>>, %arg2: memref<32x128xf32, #tpu.memory_space<vmem>>, %arg3: memref<32x128xf32, #tpu.memory_space<vmem>>, %arg4: memref<1x128xf32, #tpu.memory_space<vmem>>, %arg5: memref<1x128xf32, #tpu.memory_space<vmem>>, %arg6: memref<8x128xf32, #tpu.memory_space<vmem>>, %arg7: memref<8x128xf32, #tpu.memory_space<vmem>>) attributes {dimension_semantics = [#tpu.dimension_semantics<parallel>], iteration_bounds = array<i64: 1>, scalar_prefetch = 0 : i64, scratch_operands = 0 : i64, tpu.core_type = #tpu.core_type<tc>, window_params = [{transform_indices = @transform_0, window_bounds = array<i64: 8, 32>}, {pipeline_mode = #tpu.pipeline_mode<synchronous>, transform_indices = @transform_1, window_bounds = array<i64: 32, 128>}, {pipeline_mode = #tpu.pipeline_mode<synchronous>, transform_indices = @transform_2, window_bounds = array<i64: 32, 128>}, {pipeline_mode = #tpu.pipeline_mode<synchronous>, transform_indices = @transform_3, window_bounds = array<i64: 1, 128>}, {pipeline_mode = #tpu.pipeline_mode<synchronous>, transform_indices = @transform_4, window_bounds = array<i64: 1, 128>}, {transform_indices = @transform_5, window_bounds = array<i64: 8, 128>}, {transform_indices = @transform_6, window_bounds = array<i64: 8, 128>}]} {
    %c0 = arith.constant 0 : index
    %c0_0 = arith.constant 0 : index
    %0 = vector.load %arg1[%c0, %c0_0] : memref<8x32xf32, #tpu.memory_space<vmem>>, vector<8x32xf32>
    %c0_1 = arith.constant 0 : index
    %c0_2 = arith.constant 0 : index
    %1 = vector.load %arg2[%c0_1, %c0_2] : memref<32x128xf32, #tpu.memory_space<vmem>>, vector<32x128xf32>
    %cst = arith.constant dense<0.000000e+00> : vector<8x128xf32>
    %2 = tpu.matmul %0, %1, %cst {dimension_numbers = #tpu.dot_dimension_numbers<[1], [0], [0], [1], [0, 0, 1, 1], [], []>} : vector<8x32xf32>, vector<32x128xf32>, vector<8x128xf32> -> vector<8x128xf32>
    %c0_3 = arith.constant 0 : index
    %c0_4 = arith.constant 0 : index
    %3 = vector.load %arg4[%c0_3, %c0_4] : memref<1x128xf32, #tpu.memory_space<vmem>>, vector<1x128xf32>
    %4 = vector.broadcast %3 : vector<1x128xf32> to vector<8x128xf32>
    %5 = arith.addf %2, %4 : vector<8x128xf32>
    %c0_5 = arith.constant 0 : index
    %c0_6 = arith.constant 0 : index
    %6 = vector.load %arg3[%c0_5, %c0_6] : memref<32x128xf32, #tpu.memory_space<vmem>>, vector<32x128xf32>
    %cst_7 = arith.constant dense<0.000000e+00> : vector<8x128xf32>
    %7 = tpu.matmul %0, %6, %cst_7 {dimension_numbers = #tpu.dot_dimension_numbers<[1], [0], [0], [1], [0, 0, 1, 1], [], []>} : vector<8x32xf32>, vector<32x128xf32>, vector<8x128xf32> -> vector<8x128xf32>
    %c0_8 = arith.constant 0 : index
    %c0_9 = arith.constant 0 : index
    %8 = vector.load %arg5[%c0_8, %c0_9] : memref<1x128xf32, #tpu.memory_space<vmem>>, vector<1x128xf32>
    %9 = vector.broadcast %8 : vector<1x128xf32> to vector<8x128xf32>
    %10 = arith.addf %7, %9 : vector<8x128xf32>
    %11 = math.exp %10 : vector<8x128xf32>
    %c0_10 = arith.constant 0 : index
    %c0_11 = arith.constant 0 : index
    %12 = vector.load %arg6[%c0_10, %c0_11] : memref<8x128xf32, #tpu.memory_space<vmem>>, vector<8x128xf32>
    %13 = arith.mulf %11, %12 : vector<8x128xf32>
    %14 = arith.addf %5, %13 : vector<8x128xf32>
    %15 = math.tanh %14 : vector<8x128xf32>
    %cst_12 = arith.constant 1.000000e+00 : f32
    %16 = vector.broadcast %cst_12 : f32 to vector<8x128xf32>
    %17 = arith.mulf %15, %16 : vector<8x128xf32>
    %c0_13 = arith.constant 0 : index
    %c0_14 = arith.constant 0 : index
    %18 = vector.load %arg7[%c0_13, %c0_14] : memref<8x128xf32, #tpu.memory_space<vmem>>, vector<8x128xf32>
    tpu.vector_store %arg7[%c0_13, %c0_14], %17 {strides = array<i32>} : memref<8x128xf32, #tpu.memory_space<vmem>>, vector<8x128xf32>,
    return
  }
  func.func @transform_0(%arg0: i32) -> (i32, i32) {
    %c0_i32 = arith.constant 0 : i32
    %c0_i32_0 = arith.constant 0 : i32
    return %arg0, %c0_i32 : i32, i32
  }
  func.func @transform_1(%arg0: i32) -> (i32, i32) {
    %c0_i32 = arith.constant 0 : i32
    %c0_i32_0 = arith.constant 0 : i32
    %c0_i32_1 = arith.constant 0 : i32
    return %c0_i32, %c0_i32_0 : i32, i32
  }
  func.func @transform_2(%arg0: i32) -> (i32, i32) {
    %c0_i32 = arith.constant 0 : i32
    %c0_i32_0 = arith.constant 0 : i32
    %c0_i32_1 = arith.constant 0 : i32
    return %c0_i32, %c0_i32_0 : i32, i32
  }
  func.func @transform_3(%arg0: i32) -> (i32, i32) {
    %c0_i32 = arith.constant 0 : i32
    %c0_i32_0 = arith.constant 0 : i32
    %c0_i32_1 = arith.constant 0 : i32
    return %c0_i32, %c0_i32_0 : i32, i32
  }
  func.func @transform_4(%arg0: i32) -> (i32, i32) {
    %c0_i32 = arith.constant 0 : i32
    %c0_i32_0 = arith.constant 0 : i32
    %c0_i32_1 = arith.constant 0 : i32
    return %c0_i32, %c0_i32_0 : i32, i32
  }
  func.func @transform_5(%arg0: i32) -> (i32, i32) {
    %c0_i32 = arith.constant 0 : i32
    %c0_i32_0 = arith.constant 0 : i32
    return %arg0, %c0_i32 : i32, i32
  }
  func.func @transform_6(%arg0: i32) -> (i32, i32) {
    %c0_i32 = arith.constant 0 : i32
    %c0_i32_0 = arith.constant 0 : i32
    return %arg0, %c0_i32 : i32, i32
  }
}

</mosaic_0001>

<llo_original>
// kernel: forward.1
$region0: #{forward.1}
  #allocation0 [shape = 'u32[]', space=smem, size = 0x4, offset = 0x4, fixed_abs, tag = 'smem constant byte address 0x4 - core index']
  #allocation1 [shape = 'u32[144,128]{1,0:T(1,128)}', space=vmem, size = 0x12000, scoped, tag = 'internal scratch']
  %s0 = inlined_call_operand.vmem [shape: f32[8,32], index: 0, kind: input, shape index: {}]
  %s1 = inlined_call_operand.vmem [shape: f32[32,128], index: 1, kind: input, shape index: {}]
  %s2 = inlined_call_operand.vmem [shape: f32[32,128], index: 2, kind: input, shape index: {}]
  %s3 = inlined_call_operand.vmem [shape: f32[1,128], index: 3, kind: input, shape index: {}]
  %s4 = inlined_call_operand.vmem [shape: f32[1,128], index: 4, kind: input, shape index: {}]
  %s5 = inlined_call_operand.vmem [shape: f32[8,128], index: 5, kind: input, shape index: {}]
  %s6 = inlined_call_operand.vmem [shape: f32[8,128], index: 6, kind: output, shape index: {}]
  %s7 = sld [smem:[#allocation0]]
  $region34: #{forward.1} parent=0
    _
  %s9 = ssub.s32 1, %s7
  %s10 = scalar_select 0, %s9, %s7
  // Predicated region
  $region2: #{forward.1} parent=0 // pred_check
    _
  $region3: #{forward.1} parent=0 // pred_check_branch
    %12 = sbr.rel (0) target = $region5
  $region4: #{forward.1} parent=0 // pred_region
    _
  $region5: #{forward.1} parent=0 // pred_fallthru
    _
  // Predicated region
  $region6: #{forward.1} parent=0 // pred_check
    _
  $region7: #{forward.1} parent=0 // pred_check_branch
    %14 = sbr.rel (0) target = $region9
  $region8: #{forward.1} parent=0 // pred_region
    _
  $region9: #{forward.1} parent=0 // pred_fallthru
    _
  // Predicated region
  $region10: #{forward.1} parent=0 // pred_check
    _
  $region11: #{forward.1} parent=0 // pred_check_branch
    %16 = sbr.rel (0) target = $region13
  $region12: #{forward.1} parent=0 // pred_region
    _
  $region13: #{forward.1} parent=0 // pred_fallthru
    _
  // Predicated region
  $region14: #{forward.1} parent=0 // pred_check
    _
  $region15: #{forward.1} parent=0 // pred_check_branch
    %18 = sbr.rel (0) target = $region17
  $region16: #{forward.1} parent=0 // pred_region
    _
  $region17: #{forward.1} parent=0 // pred_fallthru
    _
  // Predicated region
  $region18: #{forward.1} parent=0 // pred_check
    _
  $region19: #{forward.1} parent=0 // pred_check_branch
    %20 = sbr.rel (0) target = $region21
  $region20: #{forward.1} parent=0 // pred_region
    _
  $region21: #{forward.1} parent=0 // pred_fallthru
    _
  // Predicated region
  $region22: #{forward.1} parent=0 // pred_check
    _
  $region23: #{forward.1} parent=0 // pred_check_branch
    %22 = sbr.rel (0) target = $region25
  $region24: #{forward.1} parent=0 // pred_region
    _
  $region25: #{forward.1} parent=0 // pred_fallthru
    _
  %v23 = vld [vmem:[%s0] sm:$0xff]
  %v24 = vld [vmem:[%s1] sm:$0xff]
  %v25 = vld [vmem:[%s1 + $0x8] sm:$0xff]
  %v26 = vld [vmem:[%s1 + $0x10] sm:$0xff]
  %v27 = vld [vmem:[%s1 + $0x18] sm:$0xff]
  %v28 = vld [vmem:[%s3] sm:$0x1]
  %v30 = vlaneseq
  %v31 = vshrl.u32 %v30, 7
  %v32 = vsub.s32 0, %v31
  %v33 = vrot.slane %v28, %v32
  %vm35 = vcmask 261120
  %v37 = vsel %vm35, %v23, 0
  %39 = vmatprep.subr.mxu0 0.0
  %40 = vmatpush1.msra.mxu0 %v24
  %41 = vmatprep.subr.mxu0 0.0
  %42 = vmatpush1.msra.mxu0 %v25
  %43 = vmatprep.subr.mxu0 0.0
  %44 = vmatpush1.msra.mxu0 %v26
  %45 = vmatprep.subr.mxu0 0.0
  %46 = vmatpush1.msra.mxu0 %v27
  %47 = vmatprep.subr.mxu0 0.0
  %48 = vmatpush1.msra.mxu0 0.0
  %49 = vmatprep.subr.mxu0 0.0
  %50 = vmatpush1.msra.mxu0 0.0
  %51 = vmatprep.subr.mxu0 0.0
  %52 = vmatpush1.msra.mxu0 0.0
  %53 = vmatprep.subr.mxu0 0.0
  %54 = vmatpush1.msra.mxu0 0.0
  %55 = vmatprep.subr.mxu0 0.0
  %56 = vmatpush1.msra.mxu0 0.0
  %57 = vmatprep.subr.mxu0 0.0
  %58 = vmatpush1.msra.mxu0 0.0
  %59 = vmatprep.subr.mxu0 0.0
  %60 = vmatpush1.msra.mxu0 0.0
  %61 = vmatprep.subr.mxu0 0.0
  %62 = vmatpush1.msra.mxu0 0.0
  %63 = vmatprep.subr.mxu0 0.0
  %64 = vmatpush1.msra.mxu0 0.0
  %65 = vmatprep.subr.mxu0 0.0
  %66 = vmatpush1.msra.mxu0 0.0
  %67 = vmatprep.subr.mxu0 0.0
  %68 = vmatpush1.msra.mxu0 0.0
  %69 = vmatprep.subr.mxu0 0.0
  %70 = vmatpush1.msra.mxu0 0.0
  %71 = vmatprep.subr.mxu0 0.0
  %72 = vmatpush1.msra.mxu0 0.0
  %73 = vmatprep.subr.mxu0 0.0
  %74 = vmatpush1.msra.mxu0 0.0
  %75 = vmatprep.subr.mxu0 0.0
  %76 = vmatpush1.msra.mxu0 0.0
  %77 = vmatprep.subr.mxu0 0.0
  %78 = vmatpush1.msra.mxu0 0.0
  %79 = vmatprep.subr.mxu0 0.0
  %80 = vmatpush1.msra.mxu0 0.0
  %81 = vmatprep.subr.mxu0 0.0
  %82 = vmatpush1.msra.mxu0 0.0
  %83 = vmatprep.subr.mxu0 0.0
  %84 = vmatpush1.msra.mxu0 0.0
  %85 = vmatprep.subr.mxu0 0.0
  %86 = vmatpush1.msra.mxu0 0.0
  %87 = vmatprep.subr.mxu0 0.0
  %88 = vmatpush1.msra.mxu0 0.0
  %89 = vmatprep.subr.mxu0 0.0
  %90 = vmatpush1.msra.mxu0 0.0
  %91 = vmatprep.subr.mxu0 0.0
  %92 = vmatpush1.msra.mxu0 0.0
  %93 = vmatprep.subr.mxu0 0.0
  %94 = vmatpush1.msra.mxu0 0.0
  %95 = vmatprep.subr.mxu0 0.0
  %96 = vmatpush1.msra.mxu0 0.0
  %97 = vmatprep.subr.mxu0 0.0
  %98 = vmatpush1.msra.mxu0 0.0
  %99 = vmatprep.subr.mxu0 0.0
  %100 = vmatpush1.msra.mxu0 0.0
  %101 = vmatprep.subr.mxu0 0.0
  %102 = vmatpush1.msra.mxu0 0.0
  %103 = vmatprep.mubr.f32.mxu0 0.0
  %104 = vmatmul.mubr.f32.gmra.mrb[0].mxu0 %v37
  %v105 = vpop.f32.mrb[0].mxu0
  %v106 = vadd.f32 %v33, %v105
  %v107 = vpop.f32.mrb[0].mxu0
  %108 = vdwg.mxu0
  %v109 = vld [vmem:[%s2] sm:$0xff]
  %v110 = vld [vmem:[%s2 + $0x8] sm:$0xff]
  %v111 = vld [vmem:[%s2 + $0x10] sm:$0xff]
  %v112 = vld [vmem:[%s2 + $0x18] sm:$0xff]
  %v113 = vld [vmem:[%s4] sm:$0x1]
  %v115 = vlaneseq
  %v116 = vshrl.u32 %v115, 7
  %v117 = vsub.s32 0, %v116
  %v118 = vrot.slane %v113, %v117
  %120 = vmatprep.subr.mxu0 0.0
  %121 = vmatpush1.msra.mxu0 %v109
  %122 = vmatprep.subr.mxu0 0.0
  %123 = vmatpush1.msra.mxu0 %v110
  %124 = vmatprep.subr.mxu0 0.0
  %125 = vmatpush1.msra.mxu0 %v111
  %126 = vmatprep.subr.mxu0 0.0
  %127 = vmatpush1.msra.mxu0 %v112
  %128 = vmatprep.subr.mxu0 0.0
  %129 = vmatpush1.msra.mxu0 0.0
  %130 = vmatprep.subr.mxu0 0.0
  %131 = vmatpush1.msra.mxu0 0.0
  %132 = vmatprep.subr.mxu0 0.0
  %133 = vmatpush1.msra.mxu0 0.0
  %134 = vmatprep.subr.mxu0 0.0
  %135 = vmatpush1.msra.mxu0 0.0
  %136 = vmatprep.subr.mxu0 0.0
  %137 = vmatpush1.msra.mxu0 0.0
  %138 = vmatprep.subr.mxu0 0.0
  %139 = vmatpush1.msra.mxu0 0.0
  %140 = vmatprep.subr.mxu0 0.0
  %141 = vmatpush1.msra.mxu0 0.0
  %142 = vmatprep.subr.mxu0 0.0
  %143 = vmatpush1.msra.mxu0 0.0
  %144 = vmatprep.subr.mxu0 0.0
  %145 = vmatpush1.msra.mxu0 0.0
  %146 = vmatprep.subr.mxu0 0.0
  %147 = vmatpush1.msra.mxu0 0.0
  %148 = vmatprep.subr.mxu0 0.0
  %149 = vmatpush1.msra.mxu0 0.0
  %150 = vmatprep.subr.mxu0 0.0
  %151 = vmatpush1.msra.mxu0 0.0
  %152 = vmatprep.subr.mxu0 0.0
  %153 = vmatpush1.msra.mxu0 0.0
  %154 = vmatprep.subr.mxu0 0.0
  %155 = vmatpush1.msra.mxu0 0.0
  %156 = vmatprep.subr.mxu0 0.0
  %157 = vmatpush1.msra.mxu0 0.0
  %158 = vmatprep.subr.mxu0 0.0
  %159 = vmatpush1.msra.mxu0 0.0
  %160 = vmatprep.subr.mxu0 0.0
  %161 = vmatpush1.msra.mxu0 0.0
  %162 = vmatprep.subr.mxu0 0.0
  %163 = vmatpush1.msra.mxu0 0.0
  %164 = vmatprep.subr.mxu0 0.0
  %165 = vmatpush1.msra.mxu0 0.0
  %166 = vmatprep.subr.mxu0 0.0
  %167 = vmatpush1.msra.mxu0 0.0
  %168 = vmatprep.subr.mxu0 0.0
  %169 = vmatpush1.msra.mxu0 0.0
  %170 = vmatprep.subr.mxu0 0.0
  %171 = vmatpush1.msra.mxu0 0.0
  %172 = vmatprep.subr.mxu0 0.0
  %173 = vmatpush1.msra.mxu0 0.0
  %174 = vmatprep.subr.mxu0 0.0
  %175 = vmatpush1.msra.mxu0 0.0
  %176 = vmatprep.subr.mxu0 0.0
  %177 = vmatpush1.msra.mxu0 0.0
  %178 = vmatprep.subr.mxu0 0.0
  %179 = vmatpush1.msra.mxu0 0.0
  %180 = vmatprep.subr.mxu0 0.0
  %181 = vmatpush1.msra.mxu0 0.0
  %182 = vmatprep.subr.mxu0 0.0
  %183 = vmatpush1.msra.mxu0 0.0
  %184 = vmatprep.mubr.f32.mxu0 0.0
  %185 = vmatmul.mubr.f32.gmra.mrb[0].mxu0 %v37
  %v186 = vpop.f32.mrb[0].mxu0
  %v187 = vadd.f32 %v118, %v186
  %v188 = vpop.f32.mrb[0].mxu0
  %189 = vdwg.mxu0
  %v190 = vmul.f32 %v187, 1.442695
  %v191 = vpow.pop %v190
  %v192 = vld [vmem:[%s5] sm:$0xff]
  %v193 = vmul.f32 %v191, %v192
  %v194 = vadd.f32 %v106, %v193
  %v195 = vtanh.pop %v194
  %196 = vst [vmem:[%s6] sm:$0xff] %v195
  // Predicated region
  $region26: #{forward.1} parent=0 // pred_check
    _
  $region27: #{forward.1} parent=0 // pred_check_branch
    %198 = sbr.rel (0) target = $region29
  $region28: #{forward.1} parent=0 // pred_region
    _
  $region29: #{forward.1} parent=0 // pred_fallthru
    _
  // Predicated region
  $region30: #{forward.1} parent=0 // pred_check
    _
  $region31: #{forward.1} parent=0 // pred_check_branch
    %200 = sbr.rel (0) target = $region33
  $region32: #{forward.1} parent=0 // pred_region
    _
  $region33: #{forward.1} parent=0 // pred_fallthru
    _

</llo_original>
